<compile_context>
chip_gen: v7x
topology: tpu7x:2x2x1
jax: 0.10.0
libtpu: 0.0.40
codegen_flags: <defaults>
</compile_context>

<pallas_src>
import jax
import jax.numpy as jnp
from jax.experimental import pallas as pl
from jax.experimental.pallas import tpu as pltpu
import numpy as np


def _solver_kernel(x_ref, w1_ref, b1_ref, w2_ref, b2_ref, w3_ref, b3_ref, o_ref):
    """Fused 3-layer MLP: (Linear+ReLU) x2 -> Linear."""
    x = x_ref[...]  # (TM, 784) f32 — no cast needed, input is already f32

    # Layer 1: Linear(784 -> 100) + ReLU
    h1 = jnp.dot(x, w1_ref[...], preferred_element_type=jnp.float32) + b1_ref[...]
    h1 = jnp.maximum(h1, 0.0)

    # Layer 2: Linear(100 -> 100) + ReLU
    h2 = jnp.dot(h1, w2_ref[...], preferred_element_type=jnp.float32) + b2_ref[...]
    h2 = jnp.maximum(h2, 0.0)

    # Layer 3: Linear(100 -> T_n*2), no activation
    out = jnp.dot(h2, w3_ref[...], preferred_element_type=jnp.float32) + b3_ref[...]
    o_ref[...] = out.astype(o_ref.dtype)


def solver_forward(x, params, *, block_b=256):
    """x: (B, ...) with prod(trailing dims) == 784. Returns (B, T_n*2) f32."""
    w1, b1, w2, b2, w3, b3 = params
    B = x.shape[0]
    x_flat = x.reshape(B, -1)              # matches x.view(x.shape[0], -1)
    D = x_flat.shape[1]
    O = w3.shape[1]

    # Choose the batch tile: single full block for small B, otherwise tile and
    # pad the batch up to a multiple of the tile (padded rows are discarded).
    if B <= block_b:
        tm, b_pad = B, B
    else:
        tm = block_b
        b_pad = pl.cdiv(B, tm) * tm
    if b_pad != B:
        x_flat = jnp.pad(x_flat, ((0, b_pad - B), (0, 0)))

    grid = (b_pad // tm,)

    out = pl.pallas_call(
        _solver_kernel,
        out_shape=jax.ShapeDtypeStruct((b_pad, O), jnp.float32),
        grid=grid,
        in_specs=[
            pl.BlockSpec((tm, D), lambda i: (i, 0)),        # x tile: streams per step
            pl.BlockSpec(w1.shape, lambda i: (0, 0)),       # weights/biases: constant
            pl.BlockSpec(b1.shape, lambda i: (0, 0)),       #   block index -> stay
            pl.BlockSpec(w2.shape, lambda i: (0, 0)),       #   resident in VMEM,
            pl.BlockSpec(b2.shape, lambda i: (0, 0)),       #   no re-DMA per step
            pl.BlockSpec(w3.shape, lambda i: (0, 0)),
            pl.BlockSpec(b3.shape, lambda i: (0, 0)),
        ],
        out_specs=pl.BlockSpec((tm, O), lambda i: (i, 0)),
        compiler_params=pltpu.CompilerParams(
            dimension_semantics=("parallel",),              # shard batch tiles across TCs on v7x
        ),
    )(x_flat, w1, b1, w2, b2, w3, b3)

    return out[:B]


def init_params(key, input_size=28 * 28, hidden_size=100, t_n=5):
    """Deterministic init mimicking torch.nn.Linear defaults (uniform ±1/sqrt(fan_in)).

    Weights stored as (in_features, out_features); biases as (1, out_features)
    for a TPU-friendly 2D layout."""
    out_size = t_n * 2
    ks = jax.random.split(key, 6)

    def lin(kw, kb, fan_in, fan_out):
        bound = 1.0 / np.sqrt(fan_in)
        w = jax.random.uniform(kw, (fan_in, fan_out), jnp.float32, -bound, bound)
        b = jax.random.uniform(kb, (1, fan_out), jnp.float32, -bound, bound)
        return w, b

    w1, b1 = lin(ks[0], ks[1], input_size, hidden_size)
    w2, b2 = lin(ks[2], ks[3], hidden_size, hidden_size)
    w3, b3 = lin(ks[4], ks[5], hidden_size, out_size)
    return (w1, b1, w2, b2, w3, b3)


def _reference(x, params):
    """Pure-JAX reference for a sanity check."""
    w1, b1, w2, b2, w3, b3 = params
    h = x.reshape(x.shape[0], -1)
    h = jnp.maximum(h @ w1 + b1, 0.0)
    h = jnp.maximum(h @ w2 + b2, 0.0)
    return h @ w3 + b3


if __name__ == "__main__":
    key = jax.random.PRNGKey(0)
    k_x, k_p, k_x2 = jax.random.split(key, 3)

    T_n = 5                      # output dim = T_n * 2 = 10
    B, C, H, W = 2, 1, 28, 28    # MNIST-like input -> flattened 784
    x = jax.random.normal(k_x, (B, C, H, W), dtype=jnp.float32)
    params = init_params(k_p, input_size=C * H * W, hidden_size=100, t_n=T_n)

    # Small-batch path (single grid step).
    out = jax.block_until_ready(solver_forward(x, params))
    ref = jax.block_until_ready(_reference(x, params))
    assert out.shape == (B, T_n * 2), out.shape
    np.testing.assert_allclose(np.asarray(out), np.asarray(ref), rtol=1e-5, atol=1e-5)

    # Exercise the batch-tiled (multi-step grid, resident-weight) path.
    B2 = 16
    x2 = jax.random.normal(k_x2, (B2, C, H, W), dtype=jnp.float32)
    out2 = jax.block_until_ready(solver_forward(x2, params, block_b=8))
    ref2 = jax.block_until_ready(_reference(x2, params))
    assert out2.shape == (B2, T_n * 2), out2.shape
    np.testing.assert_allclose(np.asarray(out2), np.asarray(ref2), rtol=1e-5, atol=1e-5)

    print("KERNEL_OK")
</pallas_src>

<mosaic_0001>
module attributes {stable_mosaic.version = 11 : i64} {
  func.func @_solver_kernel(%arg0: i32, %arg1: memref<2x784xf32, #tpu.memory_space<vmem>>, %arg2: memref<784x100xf32, #tpu.memory_space<vmem>>, %arg3: memref<1x100xf32, #tpu.memory_space<vmem>>, %arg4: memref<100x100xf32, #tpu.memory_space<vmem>>, %arg5: memref<1x100xf32, #tpu.memory_space<vmem>>, %arg6: memref<100x10xf32, #tpu.memory_space<vmem>>, %arg7: memref<1x10xf32, #tpu.memory_space<vmem>>, %arg8: memref<2x10xf32, #tpu.memory_space<vmem>>) attributes {dimension_semantics = [#tpu.dimension_semantics<parallel>], iteration_bounds = array<i64: 1>, scalar_prefetch = 0 : i64, scratch_operands = 0 : i64, tpu.core_type = #tpu.core_type<tc>, window_params = [{transform_indices = @transform_0, window_bounds = array<i64: 2, 784>}, {pipeline_mode = #tpu.pipeline_mode<synchronous>, transform_indices = @transform_1, window_bounds = array<i64: 784, 100>}, {pipeline_mode = #tpu.pipeline_mode<synchronous>, transform_indices = @transform_2, window_bounds = array<i64: 1, 100>}, {pipeline_mode = #tpu.pipeline_mode<synchronous>, transform_indices = @transform_3, window_bounds = array<i64: 100, 100>}, {pipeline_mode = #tpu.pipeline_mode<synchronous>, transform_indices = @transform_4, window_bounds = array<i64: 1, 100>}, {pipeline_mode = #tpu.pipeline_mode<synchronous>, transform_indices = @transform_5, window_bounds = array<i64: 100, 10>}, {pipeline_mode = #tpu.pipeline_mode<synchronous>, transform_indices = @transform_6, window_bounds = array<i64: 1, 10>}, {transform_indices = @transform_7, window_bounds = array<i64: 2, 10>}]} {
    %c0 = arith.constant 0 : index
    %c0_0 = arith.constant 0 : index
    %0 = vector.load %arg1[%c0, %c0_0] : memref<2x784xf32, #tpu.memory_space<vmem>>, vector<2x784xf32>
    %c0_1 = arith.constant 0 : index
    %c0_2 = arith.constant 0 : index
    %1 = vector.load %arg2[%c0_1, %c0_2] : memref<784x100xf32, #tpu.memory_space<vmem>>, vector<784x100xf32>
    %cst = arith.constant dense<0.000000e+00> : vector<2x100xf32>
    %2 = tpu.matmul %0, %1, %cst {dimension_numbers = #tpu.dot_dimension_numbers<[1], [0], [0], [1], [0, 0, 1, 1], [], []>} : vector<2x784xf32>, vector<784x100xf32>, vector<2x100xf32> -> vector<2x100xf32>
    %c0_3 = arith.constant 0 : index
    %c0_4 = arith.constant 0 : index
    %3 = vector.load %arg3[%c0_3, %c0_4] : memref<1x100xf32, #tpu.memory_space<vmem>>, vector<1x100xf32>
    %4 = vector.broadcast %3 : vector<1x100xf32> to vector<2x100xf32>
    %5 = arith.addf %2, %4 : vector<2x100xf32>
    %cst_5 = arith.constant 0.000000e+00 : f32
    %6 = vector.broadcast %cst_5 : f32 to vector<2x100xf32>
    %7 = arith.maximumf %5, %6 : vector<2x100xf32>
    %c0_6 = arith.constant 0 : index
    %c0_7 = arith.constant 0 : index
    %8 = vector.load %arg4[%c0_6, %c0_7] : memref<100x100xf32, #tpu.memory_space<vmem>>, vector<100x100xf32>
    %cst_8 = arith.constant dense<0.000000e+00> : vector<2x100xf32>
    %9 = tpu.matmul %7, %8, %cst_8 {dimension_numbers = #tpu.dot_dimension_numbers<[1], [0], [0], [1], [0, 0, 1, 1], [], []>} : vector<2x100xf32>, vector<100x100xf32>, vector<2x100xf32> -> vector<2x100xf32>
    %c0_9 = arith.constant 0 : index
    %c0_10 = arith.constant 0 : index
    %10 = vector.load %arg5[%c0_9, %c0_10] : memref<1x100xf32, #tpu.memory_space<vmem>>, vector<1x100xf32>
    %11 = vector.broadcast %10 : vector<1x100xf32> to vector<2x100xf32>
    %12 = arith.addf %9, %11 : vector<2x100xf32>
    %cst_11 = arith.constant 0.000000e+00 : f32
    %13 = vector.broadcast %cst_11 : f32 to vector<2x100xf32>
    %14 = arith.maximumf %12, %13 : vector<2x100xf32>
    %c0_12 = arith.constant 0 : index
    %c0_13 = arith.constant 0 : index
    %15 = vector.load %arg6[%c0_12, %c0_13] : memref<100x10xf32, #tpu.memory_space<vmem>>, vector<100x10xf32>
    %cst_14 = arith.constant dense<0.000000e+00> : vector<2x10xf32>
    %16 = tpu.matmul %14, %15, %cst_14 {dimension_numbers = #tpu.dot_dimension_numbers<[1], [0], [0], [1], [0, 0, 1, 1], [], []>} : vector<2x100xf32>, vector<100x10xf32>, vector<2x10xf32> -> vector<2x10xf32>
    %c0_15 = arith.constant 0 : index
    %c0_16 = arith.constant 0 : index
    %17 = vector.load %arg7[%c0_15, %c0_16] : memref<1x10xf32, #tpu.memory_space<vmem>>, vector<1x10xf32>
    %18 = vector.broadcast %17 : vector<1x10xf32> to vector<2x10xf32>
    %19 = arith.addf %16, %18 : vector<2x10xf32>
    %c0_17 = arith.constant 0 : index
    %c0_18 = arith.constant 0 : index
    %20 = vector.load %arg8[%c0_17, %c0_18] : memref<2x10xf32, #tpu.memory_space<vmem>>, vector<2x10xf32>
    tpu.vector_store %arg8[%c0_17, %c0_18], %19 {strides = array<i32>} : memref<2x10xf32, #tpu.memory_space<vmem>>, vector<2x10xf32>,
    return
  }
  func.func @transform_0(%arg0: i32) -> (i32, i32) {
    %c0_i32 = arith.constant 0 : i32
    %c0_i32_0 = arith.constant 0 : i32
    return %arg0, %c0_i32 : i32, i32
  }
  func.func @transform_1(%arg0: i32) -> (i32, i32) {
    %c0_i32 = arith.constant 0 : i32
    %c0_i32_0 = arith.constant 0 : i32
    %c0_i32_1 = arith.constant 0 : i32
    return %c0_i32, %c0_i32_0 : i32, i32
  }
  func.func @transform_2(%arg0: i32) -> (i32, i32) {
    %c0_i32 = arith.constant 0 : i32
    %c0_i32_0 = arith.constant 0 : i32
    %c0_i32_1 = arith.constant 0 : i32
    return %c0_i32, %c0_i32_0 : i32, i32
  }
  func.func @transform_3(%arg0: i32) -> (i32, i32) {
    %c0_i32 = arith.constant 0 : i32
    %c0_i32_0 = arith.constant 0 : i32
    %c0_i32_1 = arith.constant 0 : i32
    return %c0_i32, %c0_i32_0 : i32, i32
  }
  func.func @transform_4(%arg0: i32) -> (i32, i32) {
    %c0_i32 = arith.constant 0 : i32
    %c0_i32_0 = arith.constant 0 : i32
    %c0_i32_1 = arith.constant 0 : i32
    return %c0_i32, %c0_i32_0 : i32, i32
  }
  func.func @transform_5(%arg0: i32) -> (i32, i32) {
    %c0_i32 = arith.constant 0 : i32
    %c0_i32_0 = arith.constant 0 : i32
    %c0_i32_1 = arith.constant 0 : i32
    return %c0_i32, %c0_i32_0 : i32, i32
  }
  func.func @transform_6(%arg0: i32) -> (i32, i32) {
    %c0_i32 = arith.constant 0 : i32
    %c0_i32_0 = arith.constant 0 : i32
    %c0_i32_1 = arith.constant 0 : i32
    return %c0_i32, %c0_i32_0 : i32, i32
  }
  func.func @transform_7(%arg0: i32) -> (i32, i32) {
    %c0_i32 = arith.constant 0 : i32
    %c0_i32_0 = arith.constant 0 : i32
    return %arg0, %c0_i32 : i32, i32
  }
}

</mosaic_0001>

<llo_original>
// kernel: tpu_custom_call.1
$region0: #{tpu_custom_call.1}
  #allocation0 [shape = 'u32[]', space=smem, size = 0x4, offset = 0x4, fixed_abs, tag = 'smem constant byte address 0x4 - core index']
  #allocation1 [shape = 'u32[144,128]{1,0:T(1,128)}', space=vmem, size = 0x12000, scoped, tag = 'internal scratch']
  %s0 = inlined_call_operand.vmem [shape: f32[2,784], index: 0, kind: input, shape index: {}]
  %s1 = inlined_call_operand.vmem [shape: f32[784,100], index: 1, kind: input, shape index: {}]
  %s2 = inlined_call_operand.vmem [shape: f32[1,100], index: 2, kind: input, shape index: {}]
  %s3 = inlined_call_operand.vmem [shape: f32[100,100], index: 3, kind: input, shape index: {}]
  %s4 = inlined_call_operand.vmem [shape: f32[1,100], index: 4, kind: input, shape index: {}]
  %s5 = inlined_call_operand.vmem [shape: f32[100,10], index: 5, kind: input, shape index: {}]
  %s6 = inlined_call_operand.vmem [shape: f32[1,10], index: 6, kind: input, shape index: {}]
  %s7 = inlined_call_operand.hbm [shape: f32[2,10], index: 7, kind: output, shape index: {}]
  %s8 = sld [smem:[#allocation0]]
  $region38: #{tpu_custom_call.1} parent=0
    _
  %s10 = ssub.s32 1, %s8
  %s11 = scalar_select 0, %s10, %s8
  $region1: #{tpu_custom_call.1} parent=0
    #allocation2 [shape = 'u8[1024]{0}', space=vmem, size = 0x400, scoped, tag = 'output window, operand 0, single buffered']
    #allocation3 [shape = 's32[1]{0}', space=sflag, size = 0x4, scoped, tag = 'scoped memory for tpu_custom_call.1']
    %12 = vsyncpa [#allocation3], 0
    // Predicated region
    $region2: #{tpu_custom_call.1} parent=1 // pred_check
      _
    $region3: #{tpu_custom_call.1} parent=1 // pred_check_branch
      %14 = sbr.rel (0) target = $region5
    $region4: #{tpu_custom_call.1} parent=1 // pred_region
      _
    $region5: #{tpu_custom_call.1} parent=1 // pred_fallthru
      _
    // Predicated region
    $region6: #{tpu_custom_call.1} parent=1 // pred_check
      _
    $region7: #{tpu_custom_call.1} parent=1 // pred_check_branch
      %16 = sbr.rel (0) target = $region9
    $region8: #{tpu_custom_call.1} parent=1 // pred_region
      _
    $region9: #{tpu_custom_call.1} parent=1 // pred_fallthru
      _
    // Predicated region
    $region10: #{tpu_custom_call.1} parent=1 // pred_check
      _
    $region11: #{tpu_custom_call.1} parent=1 // pred_check_branch
      %18 = sbr.rel (0) target = $region13
    $region12: #{tpu_custom_call.1} parent=1 // pred_region
      _
    $region13: #{tpu_custom_call.1} parent=1 // pred_fallthru
      _
    // Predicated region
    $region14: #{tpu_custom_call.1} parent=1 // pred_check
      _
    $region15: #{tpu_custom_call.1} parent=1 // pred_check_branch
      %20 = sbr.rel (0) target = $region17
    $region16: #{tpu_custom_call.1} parent=1 // pred_region
      _
    $region17: #{tpu_custom_call.1} parent=1 // pred_fallthru
      _
    // Predicated region
    $region18: #{tpu_custom_call.1} parent=1 // pred_check
      _
    $region19: #{tpu_custom_call.1} parent=1 // pred_check_branch
      %22 = sbr.rel (0) target = $region21
    $region20: #{tpu_custom_call.1} parent=1 // pred_region
      _
    $region21: #{tpu_custom_call.1} parent=1 // pred_fallthru
      _
    // Predicated region
    $region22: #{tpu_custom_call.1} parent=1 // pred_check
      _
    $region23: #{tpu_custom_call.1} parent=1 // pred_check_branch
      %24 = sbr.rel (0) target = $region25
    $region24: #{tpu_custom_call.1} parent=1 // pred_region
      _
    $region25: #{tpu_custom_call.1} parent=1 // pred_fallthru
      _
    // Predicated region
    $region26: #{tpu_custom_call.1} parent=1 // pred_check
      _
    $region27: #{tpu_custom_call.1} parent=1 // pred_check_branch
      %26 = sbr.rel (0) target = $region29
    $region28: #{tpu_custom_call.1} parent=1 // pred_region
      _
    $region29: #{tpu_custom_call.1} parent=1 // pred_fallthru
      _
    %v27 = vld [vmem:[%s0] sm:$0xff]
    %v28 = vld [vmem:[%s0 + $0x8] sm:$0x3f]
    %v29 = vld [vmem:[%s1] sm:$0xff]
    %v30 = vld [vmem:[%s1 + $0x8] sm:$0xff]
    %v31 = vld [vmem:[%s1 + $0x10] sm:$0xff]
    %v32 = vld [vmem:[%s1 + $0x18] sm:$0xff]
    %v33 = vld [vmem:[%s1 + $0x20] sm:$0xff]
    %v34 = vld [vmem:[%s1 + $0x28] sm:$0xff]
    %v35 = vld [vmem:[%s1 + $0x30] sm:$0xff]
    %v36 = vld [vmem:[%s1 + $0x38] sm:$0xff]
    %v37 = vld [vmem:[%s1 + $0x40] sm:$0xff]
    %v38 = vld [vmem:[%s1 + $0x48] sm:$0xff]
    %v39 = vld [vmem:[%s1 + $0x50] sm:$0xff]
    %v40 = vld [vmem:[%s1 + $0x58] sm:$0xff]
    %v41 = vld [vmem:[%s1 + $0x60] sm:$0xff]
    %v42 = vld [vmem:[%s1 + $0x68] sm:$0xff]
    %v43 = vld [vmem:[%s1 + $0x70] sm:$0xff]
    %v44 = vld [vmem:[%s1 + $0x78] sm:$0xff]
    %v45 = vld [vmem:[%s1 + $0x80] sm:$0xff]
    %v46 = vld [vmem:[%s1 + $0x88] sm:$0xff]
    %v47 = vld [vmem:[%s1 + $0x90] sm:$0xff]
    %v48 = vld [vmem:[%s1 + $0x98] sm:$0xff]
    %v49 = vld [vmem:[%s1 + $0xa0] sm:$0xff]
    %v50 = vld [vmem:[%s1 + $0xa8] sm:$0xff]
    %v51 = vld [vmem:[%s1 + $0xb0] sm:$0xff]
    %v52 = vld [vmem:[%s1 + $0xb8] sm:$0xff]
    %v53 = vld [vmem:[%s1 + $0xc0] sm:$0xff]
    %v54 = vld [vmem:[%s1 + $0xc8] sm:$0xff]
    %v55 = vld [vmem:[%s1 + $0xd0] sm:$0xff]
    %v56 = vld [vmem:[%s1 + $0xd8] sm:$0xff]
    %v57 = vld [vmem:[%s1 + $0xe0] sm:$0xff]
    %v58 = vld [vmem:[%s1 + $0xe8] sm:$0xff]
    %v59 = vld [vmem:[%s1 + $0xf0] sm:$0xff]
    %v60 = vld [vmem:[%s1 + $0xf8] sm:$0xff]
    %v61 = vld [vmem:[%s1 + $0x100] sm:$0xff]
    %v62 = vld [vmem:[%s1 + $0x108] sm:$0xff]
    %v63 = vld [vmem:[%s1 + $0x110] sm:$0xff]
    %v64 = vld [vmem:[%s1 + $0x118] sm:$0xff]
    %v65 = vld [vmem:[%s1 + $0x120] sm:$0xff]
    %v66 = vld [vmem:[%s1 + $0x128] sm:$0xff]
    %v67 = vld [vmem:[%s1 + $0x130] sm:$0xff]
    %v68 = vld [vmem:[%s1 + $0x138] sm:$0xff]
    %v69 = vld [vmem:[%s1 + $0x140] sm:$0xff]
    %v70 = vld [vmem:[%s1 + $0x148] sm:$0xff]
    %v71 = vld [vmem:[%s1 + $0x150] sm:$0xff]
    %v72 = vld [vmem:[%s1 + $0x158] sm:$0xff]
    %v73 = vld [vmem:[%s1 + $0x160] sm:$0xff]
    %v74 = vld [vmem:[%s1 + $0x168] sm:$0xff]
    %v75 = vld [vmem:[%s1 + $0x170] sm:$0xff]
    %v76 = vld [vmem:[%s1 + $0x178] sm:$0xff]
    %v77 = vld [vmem:[%s1 + $0x180] sm:$0xff]
    %v78 = vld [vmem:[%s1 + $0x188] sm:$0xff]
    %v79 = vld [vmem:[%s1 + $0x190] sm:$0xff]
    %v80 = vld [vmem:[%s1 + $0x198] sm:$0xff]
    %v81 = vld [vmem:[%s1 + $0x1a0] sm:$0xff]
    %v82 = vld [vmem:[%s1 + $0x1a8] sm:$0xff]
    %v83 = vld [vmem:[%s1 + $0x1b0] sm:$0xff]
    %v84 = vld [vmem:[%s1 + $0x1b8] sm:$0xff]
    %v85 = vld [vmem:[%s1 + $0x1c0] sm:$0xff]
    %v86 = vld [vmem:[%s1 + $0x1c8] sm:$0xff]
    %v87 = vld [vmem:[%s1 + $0x1d0] sm:$0xff]
    %v88 = vld [vmem:[%s1 + $0x1d8] sm:$0xff]
    %v89 = vld [vmem:[%s1 + $0x1e0] sm:$0xff]
    %v90 = vld [vmem:[%s1 + $0x1e8] sm:$0xff]
    %v91 = vld [vmem:[%s1 + $0x1f0] sm:$0xff]
    %v92 = vld [vmem:[%s1 + $0x1f8] sm:$0xff]
    %v93 = vld [vmem:[%s1 + $0x200] sm:$0xff]
    %v94 = vld [vmem:[%s1 + $0x208] sm:$0xff]
    %v95 = vld [vmem:[%s1 + $0x210] sm:$0xff]
    %v96 = vld [vmem:[%s1 + $0x218] sm:$0xff]
    %v97 = vld [vmem:[%s1 + $0x220] sm:$0xff]
    %v98 = vld [vmem:[%s1 + $0x228] sm:$0xff]
    %v99 = vld [vmem:[%s1 + $0x230] sm:$0xff]
    %v100 = vld [vmem:[%s1 + $0x238] sm:$0xff]
    %v101 = vld [vmem:[%s1 + $0x240] sm:$0xff]
    %v102 = vld [vmem:[%s1 + $0x248] sm:$0xff]
    %v103 = vld [vmem:[%s1 + $0x250] sm:$0xff]
    %v104 = vld [vmem:[%s1 + $0x258] sm:$0xff]
    %v105 = vld [vmem:[%s1 + $0x260] sm:$0xff]
    %v106 = vld [vmem:[%s1 + $0x268] sm:$0xff]
    %v107 = vld [vmem:[%s1 + $0x270] sm:$0xff]
    %v108 = vld [vmem:[%s1 + $0x278] sm:$0xff]
    %v109 = vld [vmem:[%s1 + $0x280] sm:$0xff]
    %v110 = vld [vmem:[%s1 + $0x288] sm:$0xff]
    %v111 = vld [vmem:[%s1 + $0x290] sm:$0xff]
    %v112 = vld [vmem:[%s1 + $0x298] sm:$0xff]
    %v113 = vld [vmem:[%s1 + $0x2a0] sm:$0xff]
    %v114 = vld [vmem:[%s1 + $0x2a8] sm:$0xff]
    %v115 = vld [vmem:[%s1 + $0x2b0] sm:$0xff]
    %v116 = vld [vmem:[%s1 + $0x2b8] sm:$0xff]
    %v117 = vld [vmem:[%s1 + $0x2c0] sm:$0xff]
    %v118 = vld [vmem:[%s1 + $0x2c8] sm:$0xff]
    %v119 = vld [vmem:[%s1 + $0x2d0] sm:$0xff]
    %v120 = vld [vmem:[%s1 + $0x2d8] sm:$0xff]
    %v121 = vld [vmem:[%s1 + $0x2e0] sm:$0xff]
    %v122 = vld [vmem:[%s1 + $0x2e8] sm:$0xff]
    %v123 = vld [vmem:[%s1 + $0x2f0] sm:$0xff]
    %v124 = vld [vmem:[%s1 + $0x2f8] sm:$0xff]
    %v125 = vld [vmem:[%s1 + $0x300] sm:$0xff]
    %v126 = vld [vmem:[%s1 + $0x308] sm:$0xff]
    %v127 = vld [vmem:[%s2] sm:$0x1]
    %v129 = vlaneseq
    %v130 = vshrl.u32 %v129, 7
    %v131 = vsub.s32 0, %v130
    %v132 = vrot.slane %v127, %v131
    %v136 = vcombine.high %v27, %v27
    %v138 = vunpack.c.l.s4 1983009808
    %v139 = vunpack.c.0.s8 %v138
    %v140 = vlaneseq
    %v141 = vshrl.u32 %v140, 7
    %v142 = vsub.s32 %v139, %v141
    %v143 = vrot.slane %v27, %v142
    %v145 = vunpack.c.l.s4 1983009808
    %v146 = vunpack.c.0.s8 %v145
    %v147 = vlaneseq
    %v148 = vshrl.u32 %v147, 7
    %v149 = vsub.s32 %v146, %v148
    %v150 = vrot.slane %v136, %v149
    %v151 = vcombine.high %v143, %v143
    %v152 = vcombine.high %v150, %v150
    %v153 = vcombine.high %v28, %v28
    %v155 = vunpack.c.l.s4 1983009808
    %v156 = vunpack.c.0.s8 %v155
    %v157 = vlaneseq
    %v158 = vshrl.u32 %v157, 7
    %v159 = vsub.s32 %v156, %v158
    %v160 = vrot.slane %v28, %v159
    %v162 = vunpack.c.l.s4 1983009808
    %v163 = vunpack.c.0.s8 %v162
    %v164 = vlaneseq
    %v165 = vshrl.u32 %v164, 7
    %v166 = vsub.s32 %v163, %v165
    %v167 = vrot.slane %v153, %v166
    %v168 = vcombine.high %v160, %v160
    %vm175 = vcmask 130048
    %v176 = vsel %vm175, %v167, 0
    %178 = vmatprep.subr.mxu0 0.0
    %179 = vmatpush1.msra.mxu0 %v29
    %180 = vmatprep.subr.mxu0 0.0
    %181 = vmatpush1.msra.mxu0 %v30
    %182 = vmatprep.subr.mxu0 0.0
    %183 = vmatpush1.msra.mxu0 %v31
    %184 = vmatprep.subr.mxu0 0.0
    %185 = vmatpush1.msra.mxu0 %v32
    %186 = vmatprep.subr.mxu0 0.0
    %187 = vmatpush1.msra.mxu0 %v33
    %188 = vmatprep.subr.mxu0 0.0
    %189 = vmatpush1.msra.mxu0 %v34
    %190 = vmatprep.subr.mxu0 0.0
    %191 = vmatpush1.msra.mxu0 %v35
    %192 = vmatprep.subr.mxu0 0.0
    %193 = vmatpush1.msra.mxu0 %v36
    %194 = vmatprep.subr.mxu0 0.0
    %195 = vmatpush1.msra.mxu0 %v37
    %196 = vmatprep.subr.mxu0 0.0
    %197 = vmatpush1.msra.mxu0 %v38
    %198 = vmatprep.subr.mxu0 0.0
    %199 = vmatpush1.msra.mxu0 %v39
    %200 = vmatprep.subr.mxu0 0.0
    %201 = vmatpush1.msra.mxu0 %v40
    %202 = vmatprep.subr.mxu0 0.0
    %203 = vmatpush1.msra.mxu0 %v41
    %204 = vmatprep.subr.mxu0 0.0
    %205 = vmatpush1.msra.mxu0 %v42
    %206 = vmatprep.subr.mxu0 0.0
    %207 = vmatpush1.msra.mxu0 %v43
    %208 = vmatprep.subr.mxu0 0.0
    %209 = vmatpush1.msra.mxu0 %v44
    %210 = vmatprep.subr.mxu0 0.0
    %211 = vmatpush1.msra.mxu0 %v45
    %212 = vmatprep.subr.mxu0 0.0
    %213 = vmatpush1.msra.mxu0 %v46
    %214 = vmatprep.subr.mxu0 0.0
    %215 = vmatpush1.msra.mxu0 %v47
    %216 = vmatprep.subr.mxu0 0.0
    %217 = vmatpush1.msra.mxu0 %v48
    %218 = vmatprep.subr.mxu0 0.0
    %219 = vmatpush1.msra.mxu0 %v49
    %220 = vmatprep.subr.mxu0 0.0
    %221 = vmatpush1.msra.mxu0 %v50
    %222 = vmatprep.subr.mxu0 0.0
    %223 = vmatpush1.msra.mxu0 %v51
    %224 = vmatprep.subr.mxu0 0.0
    %225 = vmatpush1.msra.mxu0 %v52
    %226 = vmatprep.subr.mxu0 0.0
    %227 = vmatpush1.msra.mxu0 %v53
    %228 = vmatprep.subr.mxu0 0.0
    %229 = vmatpush1.msra.mxu0 %v54
    %230 = vmatprep.subr.mxu0 0.0
    %231 = vmatpush1.msra.mxu0 %v55
    %232 = vmatprep.subr.mxu0 0.0
    %233 = vmatpush1.msra.mxu0 %v56
    %234 = vmatprep.subr.mxu0 0.0
    %235 = vmatpush1.msra.mxu0 %v57
    %236 = vmatprep.subr.mxu0 0.0
    %237 = vmatpush1.msra.mxu0 %v58
    %238 = vmatprep.subr.mxu0 0.0
    %239 = vmatpush1.msra.mxu0 %v59
    %240 = vmatprep.subr.mxu0 0.0
    %241 = vmatpush1.msra.mxu0 %v60
    %242 = vmatprep.mubr.f32.mxu0 %v151
    %243 = vmatmul.mubr.f32.gmra.mrb[0].mxu0 %v143
    %v244 = vpop.f32.mrb[0].mxu0
    %v245 = vadd.f32 %v132, %v244
    %v246 = vpop.f32.mrb[0].mxu0
    %247 = vdwg.mxu0
    %248 = vmatprep.subr.mxu0 0.0
    %249 = vmatpush1.msra.mxu0 %v61
    %250 = vmatprep.subr.mxu0 0.0
    %251 = vmatpush1.msra.mxu0 %v62
    %252 = vmatprep.subr.mxu0 0.0
    %253 = vmatpush1.msra.mxu0 %v63
    %254 = vmatprep.subr.mxu0 0.0
    %255 = vmatpush1.msra.mxu0 %v64
    %256 = vmatprep.subr.mxu0 0.0
    %257 = vmatpush1.msra.mxu0 %v65
    %258 = vmatprep.subr.mxu0 0.0
    %259 = vmatpush1.msra.mxu0 %v66
    %260 = vmatprep.subr.mxu0 0.0
    %261 = vmatpush1.msra.mxu0 %v67
    %262 = vmatprep.subr.mxu0 0.0
    %263 = vmatpush1.msra.mxu0 %v68
    %264 = vmatprep.subr.mxu0 0.0
    %265 = vmatpush1.msra.mxu0 %v69
    %266 = vmatprep.subr.mxu0 0.0
    %267 = vmatpush1.msra.mxu0 %v70
    %268 = vmatprep.subr.mxu0 0.0
    %269 = vmatpush1.msra.mxu0 %v71
    %270 = vmatprep.subr.mxu0 0.0
    %271 = vmatpush1.msra.mxu0 %v72
    %272 = vmatprep.subr.mxu0 0.0
    %273 = vmatpush1.msra.mxu0 %v73
    %274 = vmatprep.subr.mxu0 0.0
    %275 = vmatpush1.msra.mxu0 %v74
    %276 = vmatprep.subr.mxu0 0.0
    %277 = vmatpush1.msra.mxu0 %v75
    %278 = vmatprep.subr.mxu0 0.0
    %279 = vmatpush1.msra.mxu0 %v76
    %280 = vmatprep.subr.mxu0 0.0
    %281 = vmatpush1.msra.mxu0 %v77
    %282 = vmatprep.subr.mxu0 0.0
    %283 = vmatpush1.msra.mxu0 %v78
    %284 = vmatprep.subr.mxu0 0.0
    %285 = vmatpush1.msra.mxu0 %v79
    %286 = vmatprep.subr.mxu0 0.0
    %287 = vmatpush1.msra.mxu0 %v80
    %288 = vmatprep.subr.mxu0 0.0
    %289 = vmatpush1.msra.mxu0 %v81
    %290 = vmatprep.subr.mxu0 0.0
    %291 = vmatpush1.msra.mxu0 %v82
    %292 = vmatprep.subr.mxu0 0.0
    %293 = vmatpush1.msra.mxu0 %v83
    %294 = vmatprep.subr.mxu0 0.0
    %295 = vmatpush1.msra.mxu0 %v84
    %296 = vmatprep.subr.mxu0 0.0
    %297 = vmatpush1.msra.mxu0 %v85
    %298 = vmatprep.subr.mxu0 0.0
    %299 = vmatpush1.msra.mxu0 %v86
    %300 = vmatprep.subr.mxu0 0.0
    %301 = vmatpush1.msra.mxu0 %v87
    %302 = vmatprep.subr.mxu0 0.0
    %303 = vmatpush1.msra.mxu0 %v88
    %304 = vmatprep.subr.mxu0 0.0
    %305 = vmatpush1.msra.mxu0 %v89
    %306 = vmatprep.subr.mxu0 0.0
    %307 = vmatpush1.msra.mxu0 %v90
    %308 = vmatprep.subr.mxu0 0.0
    %309 = vmatpush1.msra.mxu0 %v91
    %310 = vmatprep.subr.mxu0 0.0
    %311 = vmatpush1.msra.mxu0 %v92
    %312 = vmatprep.mubr.f32.mxu0 %v152
    %313 = vmatmul.mubr.f32.gmra.mrb[0].mxu0 %v150
    %v314 = vpop.f32.mrb[0].mxu0
    %v315 = vadd.f32 %v245, %v314
    %v316 = vpop.f32.mrb[0].mxu0
    %317 = vdwg.mxu0
    %318 = vmatprep.subr.mxu0 0.0
    %319 = vmatpush1.msra.mxu0 %v93
    %320 = vmatprep.subr.mxu0 0.0
    %321 = vmatpush1.msra.mxu0 %v94
    %322 = vmatprep.subr.mxu0 0.0
    %323 = vmatpush1.msra.mxu0 %v95
    %324 = vmatprep.subr.mxu0 0.0
    %325 = vmatpush1.msra.mxu0 %v96
    %326 = vmatprep.subr.mxu0 0.0
    %327 = vmatpush1.msra.mxu0 %v97
    %328 = vmatprep.subr.mxu0 0.0
    %329 = vmatpush1.msra.mxu0 %v98
    %330 = vmatprep.subr.mxu0 0.0
    %331 = vmatpush1.msra.mxu0 %v99
    %332 = vmatprep.subr.mxu0 0.0
    %333 = vmatpush1.msra.mxu0 %v100
    %334 = vmatprep.subr.mxu0 0.0
    %335 = vmatpush1.msra.mxu0 %v101
    %336 = vmatprep.subr.mxu0 0.0
    %337 = vmatpush1.msra.mxu0 %v102
    %338 = vmatprep.subr.mxu0 0.0
    %339 = vmatpush1.msra.mxu0 %v103
    %340 = vmatprep.subr.mxu0 0.0
    %341 = vmatpush1.msra.mxu0 %v104
    %342 = vmatprep.subr.mxu0 0.0
    %343 = vmatpush1.msra.mxu0 %v105
    %344 = vmatprep.subr.mxu0 0.0
    %345 = vmatpush1.msra.mxu0 %v106
    %346 = vmatprep.subr.mxu0 0.0
    %347 = vmatpush1.msra.mxu0 %v107
    %348 = vmatprep.subr.mxu0 0.0
    %349 = vmatpush1.msra.mxu0 %v108
    %350 = vmatprep.subr.mxu0 0.0
    %351 = vmatpush1.msra.mxu0 %v109
    %352 = vmatprep.subr.mxu0 0.0
    %353 = vmatpush1.msra.mxu0 %v110
    %354 = vmatprep.subr.mxu0 0.0
    %355 = vmatpush1.msra.mxu0 %v111
    %356 = vmatprep.subr.mxu0 0.0
    %357 = vmatpush1.msra.mxu0 %v112
    %358 = vmatprep.subr.mxu0 0.0
    %359 = vmatpush1.msra.mxu0 %v113
    %360 = vmatprep.subr.mxu0 0.0
    %361 = vmatpush1.msra.mxu0 %v114
    %362 = vmatprep.subr.mxu0 0.0
    %363 = vmatpush1.msra.mxu0 %v115
    %364 = vmatprep.subr.mxu0 0.0
    %365 = vmatpush1.msra.mxu0 %v116
    %366 = vmatprep.subr.mxu0 0.0
    %367 = vmatpush1.msra.mxu0 %v117
    %368 = vmatprep.subr.mxu0 0.0
    %369 = vmatpush1.msra.mxu0 %v118
    %370 = vmatprep.subr.mxu0 0.0
    %371 = vmatpush1.msra.mxu0 %v119
    %372 = vmatprep.subr.mxu0 0.0
    %373 = vmatpush1.msra.mxu0 %v120
    %374 = vmatprep.subr.mxu0 0.0
    %375 = vmatpush1.msra.mxu0 %v121
    %376 = vmatprep.subr.mxu0 0.0
    %377 = vmatpush1.msra.mxu0 %v122
    %378 = vmatprep.subr.mxu0 0.0
    %379 = vmatpush1.msra.mxu0 %v123
    %380 = vmatprep.subr.mxu0 0.0
    %381 = vmatpush1.msra.mxu0 %v124
    %382 = vmatprep.mubr.f32.mxu0 %v168
    %383 = vmatmul.mubr.f32.gmra.mrb[0].mxu0 %v160
    %v384 = vpop.f32.mrb[0].mxu0
    %v385 = vadd.f32 %v315, %v384
    %v386 = vpop.f32.mrb[0].mxu0
    %387 = vdwg.mxu0
    %388 = vmatprep.subr.mxu0 0.0
    %389 = vmatpush1.msra.mxu0 %v125
    %390 = vmatprep.subr.mxu0 0.0
    %391 = vmatpush1.msra.mxu0 %v126
    %392 = vmatprep.subr.mxu0 0.0
    %393 = vmatpush1.msra.mxu0 0.0
    %394 = vmatprep.subr.mxu0 0.0
    %395 = vmatpush1.msra.mxu0 0.0
    %396 = vmatprep.subr.mxu0 0.0
    %397 = vmatpush1.msra.mxu0 0.0
    %398 = vmatprep.subr.mxu0 0.0
    %399 = vmatpush1.msra.mxu0 0.0
    %400 = vmatprep.subr.mxu0 0.0
    %401 = vmatpush1.msra.mxu0 0.0
    %402 = vmatprep.subr.mxu0 0.0
    %403 = vmatpush1.msra.mxu0 0.0
    %404 = vmatprep.subr.mxu0 0.0
    %405 = vmatpush1.msra.mxu0 0.0
    %406 = vmatprep.subr.mxu0 0.0
    %407 = vmatpush1.msra.mxu0 0.0
    %408 = vmatprep.subr.mxu0 0.0
    %409 = vmatpush1.msra.mxu0 0.0
    %410 = vmatprep.subr.mxu0 0.0
    %411 = vmatpush1.msra.mxu0 0.0
    %412 = vmatprep.subr.mxu0 0.0
    %413 = vmatpush1.msra.mxu0 0.0
    %414 = vmatprep.subr.mxu0 0.0
    %415 = vmatpush1.msra.mxu0 0.0
    %416 = vmatprep.subr.mxu0 0.0
    %417 = vmatpush1.msra.mxu0 0.0
    %418 = vmatprep.subr.mxu0 0.0
    %419 = vmatpush1.msra.mxu0 0.0
    %420 = vmatprep.subr.mxu0 0.0
    %421 = vmatpush1.msra.mxu0 0.0
    %422 = vmatprep.subr.mxu0 0.0
    %423 = vmatpush1.msra.mxu0 0.0
    %424 = vmatprep.subr.mxu0 0.0
    %425 = vmatpush1.msra.mxu0 0.0
    %426 = vmatprep.subr.mxu0 0.0
    %427 = vmatpush1.msra.mxu0 0.0
    %428 = vmatprep.subr.mxu0 0.0
    %429 = vmatpush1.msra.mxu0 0.0
    %430 = vmatprep.subr.mxu0 0.0
    %431 = vmatpush1.msra.mxu0 0.0
    %432 = vmatprep.subr.mxu0 0.0
    %433 = vmatpush1.msra.mxu0 0.0
    %434 = vmatprep.subr.mxu0 0.0
    %435 = vmatpush1.msra.mxu0 0.0
    %436 = vmatprep.subr.mxu0 0.0
    %437 = vmatpush1.msra.mxu0 0.0
    %438 = vmatprep.subr.mxu0 0.0
    %439 = vmatpush1.msra.mxu0 0.0
    %440 = vmatprep.subr.mxu0 0.0
    %441 = vmatpush1.msra.mxu0 0.0
    %442 = vmatprep.subr.mxu0 0.0
    %443 = vmatpush1.msra.mxu0 0.0
    %444 = vmatprep.subr.mxu0 0.0
    %445 = vmatpush1.msra.mxu0 0.0
    %446 = vmatprep.subr.mxu0 0.0
    %447 = vmatpush1.msra.mxu0 0.0
    %448 = vmatprep.subr.mxu0 0.0
    %449 = vmatpush1.msra.mxu0 0.0
    %450 = vmatprep.subr.mxu0 0.0
    %451 = vmatpush1.msra.mxu0 0.0
    %452 = vmatprep.mubr.f32.mxu0 0.0
    %453 = vmatmul.mubr.f32.gmra.mrb[0].mxu0 %v176
    %v454 = vpop.f32.mrb[0].mxu0
    %v455 = vadd.f32 %v385, %v454
    %v456 = vpop.f32.mrb[0].mxu0
    %457 = vdwg.mxu0
    %v458 = vmax.f32 %v455, 0.0
    %v459 = vld [vmem:[%s3] sm:$0xff]
    %v460 = vld [vmem:[%s3 + $0x8] sm:$0xff]
    %v461 = vld [vmem:[%s3 + $0x10] sm:$0xff]
    %v462 = vld [vmem:[%s3 + $0x18] sm:$0xff]
    %v463 = vld [vmem:[%s3 + $0x20] sm:$0xff]
    %v464 = vld [vmem:[%s3 + $0x28] sm:$0xff]
    %v465 = vld [vmem:[%s3 + $0x30] sm:$0xff]
    %v466 = vld [vmem:[%s3 + $0x38] sm:$0xff]
    %v467 = vld [vmem:[%s3 + $0x40] sm:$0xff]
    %v468 = vld [vmem:[%s3 + $0x48] sm:$0xff]
    %v469 = vld [vmem:[%s3 + $0x50] sm:$0xff]
    %v470 = vld [vmem:[%s3 + $0x58] sm:$0xff]
    %v471 = vld [vmem:[%s3 + $0x60] sm:$0xf]
    %v472 = vld [vmem:[%s4] sm:$0x1]
    %v474 = vlaneseq
    %v475 = vshrl.u32 %v474, 7
    %v476 = vsub.s32 0, %v475
    %v477 = vrot.slane %v472, %v476
    %vm479 = vcmask 818176
    %v481 = vsel %vm479, %v458, 0
    %vm483 = vcmask 1043456
    %v485 = vsel %vm483, %v471, 0
    %487 = vmatprep.subr.mxu0 0.0
    %488 = vmatpush1.msra.mxu0 %v459
    %489 = vmatprep.subr.mxu0 0.0
    %490 = vmatpush1.msra.mxu0 %v460
    %491 = vmatprep.subr.mxu0 0.0
    %492 = vmatpush1.msra.mxu0 %v461
    %493 = vmatprep.subr.mxu0 0.0
    %494 = vmatpush1.msra.mxu0 %v462
    %495 = vmatprep.subr.mxu0 0.0
    %496 = vmatpush1.msra.mxu0 %v463
    %497 = vmatprep.subr.mxu0 0.0
    %498 = vmatpush1.msra.mxu0 %v464
    %499 = vmatprep.subr.mxu0 0.0
    %500 = vmatpush1.msra.mxu0 %v465
    %501 = vmatprep.subr.mxu0 0.0
    %502 = vmatpush1.msra.mxu0 %v466
    %503 = vmatprep.subr.mxu0 0.0
    %504 = vmatpush1.msra.mxu0 %v467
    %505 = vmatprep.subr.mxu0 0.0
    %506 = vmatpush1.msra.mxu0 %v468
    %507 = vmatprep.subr.mxu0 0.0
    %508 = vmatpush1.msra.mxu0 %v469
    %509 = vmatprep.subr.mxu0 0.0
    %510 = vmatpush1.msra.mxu0 %v470
    %511 = vmatprep.subr.mxu0 0.0
    %512 = vmatpush1.msra.mxu0 %v485
    %513 = vmatprep.subr.mxu0 0.0
    %514 = vmatpush1.msra.mxu0 0.0
    %515 = vmatprep.subr.mxu0 0.0
    %516 = vmatpush1.msra.mxu0 0.0
    %517 = vmatprep.subr.mxu0 0.0
    %518 = vmatpush1.msra.mxu0 0.0
    %519 = vmatprep.subr.mxu0 0.0
    %520 = vmatpush1.msra.mxu0 0.0
    %521 = vmatprep.subr.mxu0 0.0
    %522 = vmatpush1.msra.mxu0 0.0
    %523 = vmatprep.subr.mxu0 0.0
    %524 = vmatpush1.msra.mxu0 0.0
    %525 = vmatprep.subr.mxu0 0.0
    %526 = vmatpush1.msra.mxu0 0.0
    %527 = vmatprep.subr.mxu0 0.0
    %528 = vmatpush1.msra.mxu0 0.0
    %529 = vmatprep.subr.mxu0 0.0
    %530 = vmatpush1.msra.mxu0 0.0
    %531 = vmatprep.subr.mxu0 0.0
    %532 = vmatpush1.msra.mxu0 0.0
    %533 = vmatprep.subr.mxu0 0.0
    %534 = vmatpush1.msra.mxu0 0.0
    %535 = vmatprep.subr.mxu0 0.0
    %536 = vmatpush1.msra.mxu0 0.0
    %537 = vmatprep.subr.mxu0 0.0
    %538 = vmatpush1.msra.mxu0 0.0
    %539 = vmatprep.subr.mxu0 0.0
    %540 = vmatpush1.msra.mxu0 0.0
    %541 = vmatprep.subr.mxu0 0.0
    %542 = vmatpush1.msra.mxu0 0.0
    %543 = vmatprep.subr.mxu0 0.0
    %544 = vmatpush1.msra.mxu0 0.0
    %545 = vmatprep.subr.mxu0 0.0
    %546 = vmatpush1.msra.mxu0 0.0
    %547 = vmatprep.subr.mxu0 0.0
    %548 = vmatpush1.msra.mxu0 0.0
    %549 = vmatprep.subr.mxu0 0.0
    %550 = vmatpush1.msra.mxu0 0.0
    %551 = vmatprep.mubr.f32.mxu0 0.0
    %552 = vmatmul.mubr.f32.gmra.mrb[0].mxu0 %v481
    %v553 = vpop.f32.mrb[0].mxu0
    %v554 = vadd.f32 %v477, %v553
    %v555 = vpop.f32.mrb[0].mxu0
    %556 = vdwg.mxu0
    %v557 = vmax.f32 %v554, 0.0
    %v558 = vld [vmem:[%s5] sm:$0xff]
    %v559 = vld [vmem:[%s5 + $0x8] sm:$0xff]
    %v560 = vld [vmem:[%s5 + $0x10] sm:$0xff]
    %v561 = vld [vmem:[%s5 + $0x18] sm:$0xff]
    %v562 = vld [vmem:[%s5 + $0x20] sm:$0xff]
    %v563 = vld [vmem:[%s5 + $0x28] sm:$0xff]
    %v564 = vld [vmem:[%s5 + $0x30] sm:$0xff]
    %v565 = vld [vmem:[%s5 + $0x38] sm:$0xff]
    %v566 = vld [vmem:[%s5 + $0x40] sm:$0xff]
    %v567 = vld [vmem:[%s5 + $0x48] sm:$0xff]
    %v568 = vld [vmem:[%s5 + $0x50] sm:$0xff]
    %v569 = vld [vmem:[%s5 + $0x58] sm:$0xff]
    %v570 = vld [vmem:[%s5 + $0x60] sm:$0xf]
    %v571 = vld [vmem:[%s6] sm:$0x1]
    %v573 = vlaneseq
    %v574 = vshrl.u32 %v573, 7
    %v575 = vsub.s32 0, %v574
    %v576 = vrot.slane %v571, %v575
    %v579 = vsel %vm479, %v557, 0
    %v582 = vsel %vm483, %v570, 0
    %584 = vmatprep.subr.mxu0 0.0
    %585 = vmatpush1.msra.mxu0 %v558
    %586 = vmatprep.subr.mxu0 0.0
    %587 = vmatpush1.msra.mxu0 %v559
    %588 = vmatprep.subr.mxu0 0.0
    %589 = vmatpush1.msra.mxu0 %v560
    %590 = vmatprep.subr.mxu0 0.0
    %591 = vmatpush1.msra.mxu0 %v561
    %592 = vmatprep.subr.mxu0 0.0
    %593 = vmatpush1.msra.mxu0 %v562
    %594 = vmatprep.subr.mxu0 0.0
    %595 = vmatpush1.msra.mxu0 %v563
    %596 = vmatprep.subr.mxu0 0.0
    %597 = vmatpush1.msra.mxu0 %v564
    %598 = vmatprep.subr.mxu0 0.0
    %599 = vmatpush1.msra.mxu0 %v565
    %600 = vmatprep.subr.mxu0 0.0
    %601 = vmatpush1.msra.mxu0 %v566
    %602 = vmatprep.subr.mxu0 0.0
    %603 = vmatpush1.msra.mxu0 %v567
    %604 = vmatprep.subr.mxu0 0.0
    %605 = vmatpush1.msra.mxu0 %v568
    %606 = vmatprep.subr.mxu0 0.0
    %607 = vmatpush1.msra.mxu0 %v569
    %608 = vmatprep.subr.mxu0 0.0
    %609 = vmatpush1.msra.mxu0 %v582
    %610 = vmatprep.subr.mxu0 0.0
    %611 = vmatpush1.msra.mxu0 0.0
    %612 = vmatprep.subr.mxu0 0.0
    %613 = vmatpush1.msra.mxu0 0.0
    %614 = vmatprep.subr.mxu0 0.0
    %615 = vmatpush1.msra.mxu0 0.0
    %616 = vmatprep.subr.mxu0 0.0
    %617 = vmatpush1.msra.mxu0 0.0
    %618 = vmatprep.subr.mxu0 0.0
    %619 = vmatpush1.msra.mxu0 0.0
    %620 = vmatprep.subr.mxu0 0.0
    %621 = vmatpush1.msra.mxu0 0.0
    %622 = vmatprep.subr.mxu0 0.0
    %623 = vmatpush1.msra.mxu0 0.0
    %624 = vmatprep.subr.mxu0 0.0
    %625 = vmatpush1.msra.mxu0 0.0
    %626 = vmatprep.subr.mxu0 0.0
    %627 = vmatpush1.msra.mxu0 0.0
    %628 = vmatprep.subr.mxu0 0.0
    %629 = vmatpush1.msra.mxu0 0.0
    %630 = vmatprep.subr.mxu0 0.0
    %631 = vmatpush1.msra.mxu0 0.0
    %632 = vmatprep.subr.mxu0 0.0
    %633 = vmatpush1.msra.mxu0 0.0
    %634 = vmatprep.subr.mxu0 0.0
    %635 = vmatpush1.msra.mxu0 0.0
    %636 = vmatprep.subr.mxu0 0.0
    %637 = vmatpush1.msra.mxu0 0.0
    %638 = vmatprep.subr.mxu0 0.0
    %639 = vmatpush1.msra.mxu0 0.0
    %640 = vmatprep.subr.mxu0 0.0
    %641 = vmatpush1.msra.mxu0 0.0
    %642 = vmatprep.subr.mxu0 0.0
    %643 = vmatpush1.msra.mxu0 0.0
    %644 = vmatprep.subr.mxu0 0.0
    %645 = vmatpush1.msra.mxu0 0.0
    %646 = vmatprep.subr.mxu0 0.0
    %647 = vmatpush1.msra.mxu0 0.0
    %648 = vmatprep.mubr.f32.mxu0 0.0
    %649 = vmatmul.mubr.f32.gmra.mrb[0].mxu0 %v579
    %v650 = vpop.f32.mrb[0].mxu0
    %v651 = vadd.f32 %v576, %v650
    %v652 = vpop.f32.mrb[0].mxu0
    %653 = vdwg.mxu0
    %vm654 = vcmask 74752
    %655 = vst.msk [vmem:[#allocation2] sm:$0x3] %vm654, %v651
    // Predicated region
    $region30: #{tpu_custom_call.1} parent=1 // pred_check
      _
    $region31: #{tpu_custom_call.1} parent=1 // pred_check_branch
      %657 = sbr.rel (0) target = $region33
    $region32: #{tpu_custom_call.1} parent=1 // pred_region
      %s659 = ssub.s32 32, 32
      %660 = vsyncadd [#allocation3], %s659
      %s662 = sshll.u32 [#allocation2], 4
      %s663 = int_to_ptr.vmem [resolvable:$true] %s662
      %665 = dma.vmem_to_hbm [thread:$0]  %s663, 32, %s7, [#allocation3]
    $region33: #{tpu_custom_call.1} parent=1 // pred_fallthru
      _
    // Predicated region
    $region34: #{tpu_custom_call.1} parent=1 // pred_check
      _
    $region35: #{tpu_custom_call.1} parent=1 // pred_check_branch
      %667 = sbr.rel (0) target = $region37
    $region36: #{tpu_custom_call.1} parent=1 // pred_region
      %668 = dma.done [#allocation3], 32
    $region37: #{tpu_custom_call.1} parent=1 // pred_fallthru
      _
    %669 = vsyncpa [#allocation3], 1

</llo_original>
